<compile_context>
chip_gen: v5e
topology: v5e:2x2
jax: 0.10.0
libtpu: 0.0.40
codegen_flags: <defaults>
</compile_context>

<pallas_src>
import functools

import jax
import jax.numpy as jnp
from jax.experimental import pallas as pl
from jax.experimental.pallas import tpu as pltpu

# Module hyper-parameters (DiceAPLLoss.__init__ defaults).
GAMMA_NEG = 4.0
GAMMA_POS = 0.0
CLIP = 0.05
EPS = 1e-08
EPS_POS = 1.0
EPS_NEG = 0.0
EPS_POS_POW = -2.5

LANES = 128
MAX_BLOCK_ROWS = 2048  # (2048, 128) f32 = 1 MiB/input/buffer -> fits all gens.


def _round_up(x, m):
    return (x + m - 1) // m * m


def _dice_apl_kernel(x_ref, t_ref, apl_ref, inter_ref, psum_ref, tsum_ref, *,
                     n_valid, block_rows, needs_mask):
    # Load and cast to f32 in-kernel (inputs may be bf16/int on the host side).
    x = x_ref[...].astype(jnp.float32)
    t = t_ref[...].astype(jnp.float32)

    probs = jax.nn.sigmoid(x)
    neg_probs = 1.0 - probs
    # if clip > 0: neg_probs = (neg_probs + clip).clamp(max=1)
    neg_probs = jnp.minimum(neg_probs + CLIP, 1.0)

    pc = jnp.maximum(probs, EPS)       # pos_probs.clamp(min=eps)
    nc = jnp.maximum(neg_probs, EPS)   # neg_probs.clamp(min=eps)

    one_m_pc = 1.0 - pc
    pos_loss = t * (jnp.log(pc)
                    + EPS_POS * one_m_pc
                    + (EPS_POS_POW * 0.5) * one_m_pc * one_m_pc)
    neg_loss = (1.0 - t) * (jnp.log(nc) + EPS_NEG * nc)
    apl = pos_loss + neg_loss

    # Asymmetric focusing weight: (1 - pt) ** (gamma_pos*t + gamma_neg*(1-t)).
    pt = probs * t + neg_probs * (1.0 - t)
    gamma = GAMMA_POS * t + GAMMA_NEG * (1.0 - t)
    omp = 1.0 - pt  # >= 0 by construction
    # IEEE pow semantics for base >= 0 (0**0 = 1, 0**g = 0 for g > 0).
    safe_log = jnp.log(jnp.where(omp > 0.0, omp, 1.0))
    focusing = jnp.where(omp > 0.0,
                         jnp.exp(gamma * safe_log),
                         jnp.where(gamma == 0.0, 1.0, 0.0))
    apl = apl * focusing

    p_times_t = probs * t
    p_val = probs
    t_val = t

    if needs_mask:
        # Mask out elements beyond the valid length (ragged / padded tail).
        base = pl.program_id(0) * (block_rows * LANES)
        row = jax.lax.broadcasted_iota(jnp.int32, (block_rows, LANES), 0)
        lane = jax.lax.broadcasted_iota(jnp.int32, (block_rows, LANES), 1)
        valid = (base + row * LANES + lane) < n_valid
        zero = jnp.zeros_like(apl)
        apl = jnp.where(valid, apl, zero)
        p_times_t = jnp.where(valid, p_times_t, zero)
        p_val = jnp.where(valid, p_val, zero)
        t_val = jnp.where(valid, t_val, zero)

    # Per-block lane-dense partial sums (sublane reduce only; the cross-lane
    # and cross-block reductions happen once in the JAX epilogue).
    apl_ref[...] = jnp.sum(apl, axis=0, keepdims=True).reshape(1, 1, LANES)
    inter_ref[...] = jnp.sum(p_times_t, axis=0, keepdims=True).reshape(1, 1, LANES)
    psum_ref[...] = jnp.sum(p_val, axis=0, keepdims=True).reshape(1, 1, LANES)
    tsum_ref[...] = jnp.sum(t_val, axis=0, keepdims=True).reshape(1, 1, LANES)


@jax.jit
def dice_apl_loss(logits, targets):
    assert logits.shape == targets.shape
    n_total = logits.size

    flat_x = logits.reshape(-1)
    flat_t = targets.reshape(-1)

    # Pad to a multiple of 128 lanes only when required (static check, so the
    # common case incurs no pad copy).  Padded elements are masked in-kernel.
    lane_pad = _round_up(n_total, LANES) - n_total
    if lane_pad:
        flat_x = jnp.pad(flat_x, (0, lane_pad))
        flat_t = jnp.pad(flat_t, (0, lane_pad))
    rows = (n_total + lane_pad) // LANES

    # Large blocks to amortize per-grid-step overhead; for small inputs take
    # the whole array as a single block (always a legal block shape).
    block_rows = rows if rows <= MAX_BLOCK_ROWS else MAX_BLOCK_ROWS
    num_blocks = pl.cdiv(rows, block_rows)
    needs_mask = (num_blocks * block_rows * LANES != n_total)

    x2 = flat_x.reshape(rows, LANES)
    t2 = flat_t.reshape(rows, LANES)

    kernel = functools.partial(_dice_apl_kernel, n_valid=n_total,
                               block_rows=block_rows, needs_mask=needs_mask)

    tile_spec = pl.BlockSpec((block_rows, LANES), lambda i: (i, 0))
    part_shape = jax.ShapeDtypeStruct((num_blocks, 1, LANES), jnp.float32)
    part_spec = pl.BlockSpec((1, 1, LANES), lambda i: (i, 0, 0))

    n_proc = num_blocks * block_rows * LANES
    cost = pl.CostEstimate(
        flops=30 * n_proc,
        transcendentals=6 * n_proc,
        bytes_accessed=(x2.size * x2.dtype.itemsize
                        + t2.size * t2.dtype.itemsize
                        + 4 * num_blocks * LANES * 4),
    )

    apl_p, inter_p, p_p, t_p = pl.pallas_call(
        kernel,
        out_shape=(part_shape, part_shape, part_shape, part_shape),
        grid_spec=pltpu.PrefetchScalarGridSpec(
            num_scalar_prefetch=0,
            grid=(num_blocks,),
            in_specs=[tile_spec, tile_spec],
            out_specs=(part_spec, part_spec, part_spec, part_spec),
        ),
        compiler_params=pltpu.CompilerParams(
            dimension_semantics=("parallel",)),
        cost_estimate=cost,
    )(x2, t2)

    apl_sum = jnp.sum(apl_p)
    inter = jnp.sum(inter_p)
    psum = jnp.sum(p_p)
    tsum = jnp.sum(t_p)

    smooth = 1.0
    dice_score = (2.0 * inter + smooth) / (psum + tsum + smooth)
    dice_loss = 1.0 - dice_score
    # sum(apl_loss - dice_loss) == sum(apl_loss) - n_total * dice_loss
    return apl_sum - n_total * dice_loss


def _reference(logits, targets):
    """Pure-JAX mirror of the PyTorch forward, for a correctness check."""
    logits = logits.astype(jnp.float32)
    targets = targets.astype(jnp.float32)
    probs = jax.nn.sigmoid(logits)
    neg_probs = jnp.minimum((1.0 - probs) + CLIP, 1.0)
    pc = jnp.maximum(probs, EPS)
    nc = jnp.maximum(neg_probs, EPS)
    pos_loss = targets * (jnp.log(pc) + EPS_POS * (1.0 - pc)
                          + EPS_POS_POW * 0.5 * (1.0 - pc) ** 2)
    neg_loss = (1.0 - targets) * (jnp.log(nc) + EPS_NEG * nc)
    apl = pos_loss + neg_loss
    pt = probs * targets + neg_probs * (1.0 - targets)
    gamma = GAMMA_POS * targets + GAMMA_NEG * (1.0 - targets)
    apl = apl * jnp.power(1.0 - pt, gamma)
    smooth = 1.0
    inter = jnp.sum(probs * targets)
    dice_score = (2.0 * inter + smooth) / (jnp.sum(probs) + jnp.sum(targets) + smooth)
    dice_loss = 1.0 - dice_score
    return jnp.sum(apl - dice_loss)


if __name__ == "__main__":
    key = jax.random.PRNGKey(0)

    # Case 1: segmentation-style logits/targets, sizes divide evenly (no mask).
    k1, k2, k3, k4 = jax.random.split(key, 4)
    logits = jax.random.normal(k1, (2, 4, 16, 16), dtype=jnp.float32) * 2.0
    targets = (jax.random.uniform(k2, (2, 4, 16, 16)) > 0.5).astype(jnp.float32)
    out = jax.block_until_ready(dice_apl_loss(logits, targets))
    ref = jax.block_until_ready(_reference(logits, targets))
    assert jnp.allclose(out, ref, rtol=1e-4, atol=1e-3), (out, ref)

    # Case 2: ragged size exercising the in-kernel tail mask.
    logits2 = jax.random.normal(k3, (2, 3, 15, 17), dtype=jnp.float32) * 2.0
    targets2 = (jax.random.uniform(k4, (2, 3, 15, 17)) > 0.5).astype(jnp.float32)
    out2 = jax.block_until_ready(dice_apl_loss(logits2, targets2))
    ref2 = jax.block_until_ready(_reference(logits2, targets2))
    assert jnp.allclose(out2, ref2, rtol=1e-4, atol=1e-3), (out2, ref2)

    print("KERNEL_OK")
</pallas_src>

<mosaic_0001>
module attributes {stable_mosaic.version = 11 : i64} {
  func.func @_dice_apl_kernel(%arg0: i32, %arg1: memref<16x128xf32, #tpu.memory_space<vmem>>, %arg2: memref<16x128xf32, #tpu.memory_space<vmem>>, %arg3: memref<1x1x128xf32, #tpu.memory_space<vmem>>, %arg4: memref<1x1x128xf32, #tpu.memory_space<vmem>>, %arg5: memref<1x1x128xf32, #tpu.memory_space<vmem>>, %arg6: memref<1x1x128xf32, #tpu.memory_space<vmem>>) attributes {dimension_semantics = [#tpu.dimension_semantics<parallel>], iteration_bounds = array<i64: 1>, scalar_prefetch = 0 : i64, scratch_operands = 0 : i64, tpu.core_type = #tpu.core_type<tc>, window_params = [{transform_indices = @transform_0, window_bounds = array<i64: 16, 128>}, {transform_indices = @transform_1, window_bounds = array<i64: 16, 128>}, {transform_indices = @transform_2, window_bounds = array<i64: 1, 1, 128>}, {transform_indices = @transform_3, window_bounds = array<i64: 1, 1, 128>}, {transform_indices = @transform_4, window_bounds = array<i64: 1, 1, 128>}, {transform_indices = @transform_5, window_bounds = array<i64: 1, 1, 128>}]} {
    %c0 = arith.constant 0 : index
    %c0_0 = arith.constant 0 : index
    %0 = vector.load %arg1[%c0, %c0_0] : memref<16x128xf32, #tpu.memory_space<vmem>>, vector<16x128xf32>
    %c0_1 = arith.constant 0 : index
    %c0_2 = arith.constant 0 : index
    %1 = vector.load %arg2[%c0_1, %c0_2] : memref<16x128xf32, #tpu.memory_space<vmem>>, vector<16x128xf32>
    %2 = arith.negf %0 : vector<16x128xf32>
    %3 = math.exp %2 : vector<16x128xf32>
    %cst = arith.constant 1.000000e+00 : f32
    %4 = vector.broadcast %cst : f32 to vector<16x128xf32>
    %5 = arith.addf %4, %3 : vector<16x128xf32>
    %6 = arith.divf %4, %5 : vector<16x128xf32>
    %cst_3 = arith.constant 1.000000e+00 : f32
    %7 = vector.broadcast %cst_3 : f32 to vector<16x128xf32>
    %8 = arith.subf %7, %6 : vector<16x128xf32>
    %cst_4 = arith.constant 5.000000e-02 : f32
    %9 = vector.broadcast %cst_4 : f32 to vector<16x128xf32>
    %10 = arith.addf %8, %9 : vector<16x128xf32>
    %cst_5 = arith.constant 1.000000e+00 : f32
    %11 = vector.broadcast %cst_5 : f32 to vector<16x128xf32>
    %12 = arith.minimumf %10, %11 : vector<16x128xf32>
    %cst_6 = arith.constant 9.99999993E-9 : f32
    %13 = vector.broadcast %cst_6 : f32 to vector<16x128xf32>
    %14 = arith.maximumf %6, %13 : vector<16x128xf32>
    %cst_7 = arith.constant 9.99999993E-9 : f32
    %15 = vector.broadcast %cst_7 : f32 to vector<16x128xf32>
    %16 = arith.maximumf %12, %15 : vector<16x128xf32>
    %cst_8 = arith.constant 1.000000e+00 : f32
    %17 = vector.broadcast %cst_8 : f32 to vector<16x128xf32>
    %18 = arith.subf %17, %14 : vector<16x128xf32>
    %19 = math.log %14 : vector<16x128xf32>
    %cst_9 = arith.constant 1.000000e+00 : f32
    %20 = vector.broadcast %cst_9 : f32 to vector<16x128xf32>
    %21 = arith.mulf %20, %18 : vector<16x128xf32>
    %22 = arith.addf %19, %21 : vector<16x128xf32>
    %cst_10 = arith.constant -1.250000e+00 : f32
    %23 = vector.broadcast %cst_10 : f32 to vector<16x128xf32>
    %24 = arith.mulf %23, %18 : vector<16x128xf32>
    %25 = arith.mulf %24, %18 : vector<16x128xf32>
    %26 = arith.addf %22, %25 : vector<16x128xf32>
    %27 = arith.mulf %1, %26 : vector<16x128xf32>
    %cst_11 = arith.constant 1.000000e+00 : f32
    %28 = vector.broadcast %cst_11 : f32 to vector<16x128xf32>
    %29 = arith.subf %28, %1 : vector<16x128xf32>
    %30 = math.log %16 : vector<16x128xf32>
    %cst_12 = arith.constant 0.000000e+00 : f32
    %31 = vector.broadcast %cst_12 : f32 to vector<16x128xf32>
    %32 = arith.mulf %31, %16 : vector<16x128xf32>
    %33 = arith.addf %30, %32 : vector<16x128xf32>
    %34 = arith.mulf %29, %33 : vector<16x128xf32>
    %35 = arith.addf %27, %34 : vector<16x128xf32>
    %36 = arith.mulf %6, %1 : vector<16x128xf32>
    %cst_13 = arith.constant 1.000000e+00 : f32
    %37 = vector.broadcast %cst_13 : f32 to vector<16x128xf32>
    %38 = arith.subf %37, %1 : vector<16x128xf32>
    %39 = arith.mulf %12, %38 : vector<16x128xf32>
    %40 = arith.addf %36, %39 : vector<16x128xf32>
    %cst_14 = arith.constant 0.000000e+00 : f32
    %41 = vector.broadcast %cst_14 : f32 to vector<16x128xf32>
    %42 = arith.mulf %41, %1 : vector<16x128xf32>
    %cst_15 = arith.constant 1.000000e+00 : f32
    %43 = vector.broadcast %cst_15 : f32 to vector<16x128xf32>
    %44 = arith.subf %43, %1 : vector<16x128xf32>
    %cst_16 = arith.constant 4.000000e+00 : f32
    %45 = vector.broadcast %cst_16 : f32 to vector<16x128xf32>
    %46 = arith.mulf %45, %44 : vector<16x128xf32>
    %47 = arith.addf %42, %46 : vector<16x128xf32>
    %cst_17 = arith.constant 1.000000e+00 : f32
    %48 = vector.broadcast %cst_17 : f32 to vector<16x128xf32>
    %49 = arith.subf %48, %40 : vector<16x128xf32>
    %cst_18 = arith.constant 0.000000e+00 : f32
    %50 = vector.broadcast %cst_18 : f32 to vector<16x128xf32>
    %51 = arith.cmpf ogt, %49, %50 : vector<16x128xf32>
    %cst_19 = arith.constant 1.000000e+00 : f32
    %52 = vector.broadcast %cst_19 : f32 to vector<16x128xf32>
    %53 = arith.select %51, %49, %52 : vector<16x128xi1>, vector<16x128xf32>
    %54 = math.log %53 : vector<16x128xf32>
    %cst_20 = arith.constant 0.000000e+00 : f32
    %55 = vector.broadcast %cst_20 : f32 to vector<16x128xf32>
    %56 = arith.cmpf ogt, %49, %55 : vector<16x128xf32>
    %57 = arith.mulf %47, %54 : vector<16x128xf32>
    %58 = math.exp %57 : vector<16x128xf32>
    %cst_21 = arith.constant 0.000000e+00 : f32
    %59 = vector.broadcast %cst_21 : f32 to vector<16x128xf32>
    %60 = arith.cmpf oeq, %47, %59 : vector<16x128xf32>
    %cst_22 = arith.constant 1.000000e+00 : f32
    %cst_23 = arith.constant 0.000000e+00 : f32
    %61 = vector.broadcast %cst_22 : f32 to vector<16x128xf32>
    %62 = vector.broadcast %cst_23 : f32 to vector<16x128xf32>
    %63 = arith.select %60, %61, %62 : vector<16x128xi1>, vector<16x128xf32>
    %64 = arith.select %56, %58, %63 : vector<16x128xi1>, vector<16x128xf32>
    %65 = arith.mulf %35, %64 : vector<16x128xf32>
    %66 = arith.mulf %6, %1 : vector<16x128xf32>
    %cst_24 = arith.constant dense<0.000000e+00> : vector<128xf32>
    %67 = vector.multi_reduction <add>, %65, %cst_24 [0] : vector<16x128xf32> to vector<128xf32>
    %68 = vector.shape_cast %67 : vector<128xf32> to vector<1x128xf32>
    %69 = vector.shape_cast %68 : vector<1x128xf32> to vector<1x1x128xf32>
    %c0_25 = arith.constant 0 : index
    %c0_26 = arith.constant 0 : index
    %c0_27 = arith.constant 0 : index
    %70 = vector.load %arg3[%c0_25, %c0_26, %c0_27] : memref<1x1x128xf32, #tpu.memory_space<vmem>>, vector<1x1x128xf32>
    tpu.vector_store %arg3[%c0_25, %c0_26, %c0_27], %69 {strides = array<i32>} : memref<1x1x128xf32, #tpu.memory_space<vmem>>, vector<1x1x128xf32>,
    %cst_28 = arith.constant dense<0.000000e+00> : vector<128xf32>
    %71 = vector.multi_reduction <add>, %66, %cst_28 [0] : vector<16x128xf32> to vector<128xf32>
    %72 = vector.shape_cast %71 : vector<128xf32> to vector<1x128xf32>
    %73 = vector.shape_cast %72 : vector<1x128xf32> to vector<1x1x128xf32>
    %c0_29 = arith.constant 0 : index
    %c0_30 = arith.constant 0 : index
    %c0_31 = arith.constant 0 : index
    %74 = vector.load %arg4[%c0_29, %c0_30, %c0_31] : memref<1x1x128xf32, #tpu.memory_space<vmem>>, vector<1x1x128xf32>
    tpu.vector_store %arg4[%c0_29, %c0_30, %c0_31], %73 {strides = array<i32>} : memref<1x1x128xf32, #tpu.memory_space<vmem>>, vector<1x1x128xf32>,
    %cst_32 = arith.constant dense<0.000000e+00> : vector<128xf32>
    %75 = vector.multi_reduction <add>, %6, %cst_32 [0] : vector<16x128xf32> to vector<128xf32>
    %76 = vector.shape_cast %75 : vector<128xf32> to vector<1x128xf32>
    %77 = vector.shape_cast %76 : vector<1x128xf32> to vector<1x1x128xf32>
    %c0_33 = arith.constant 0 : index
    %c0_34 = arith.constant 0 : index
    %c0_35 = arith.constant 0 : index
    %78 = vector.load %arg5[%c0_33, %c0_34, %c0_35] : memref<1x1x128xf32, #tpu.memory_space<vmem>>, vector<1x1x128xf32>
    tpu.vector_store %arg5[%c0_33, %c0_34, %c0_35], %77 {strides = array<i32>} : memref<1x1x128xf32, #tpu.memory_space<vmem>>, vector<1x1x128xf32>,
    %cst_36 = arith.constant dense<0.000000e+00> : vector<128xf32>
    %79 = vector.multi_reduction <add>, %1, %cst_36 [0] : vector<16x128xf32> to vector<128xf32>
    %80 = vector.shape_cast %79 : vector<128xf32> to vector<1x128xf32>
    %81 = vector.shape_cast %80 : vector<1x128xf32> to vector<1x1x128xf32>
    %c0_37 = arith.constant 0 : index
    %c0_38 = arith.constant 0 : index
    %c0_39 = arith.constant 0 : index
    %82 = vector.load %arg6[%c0_37, %c0_38, %c0_39] : memref<1x1x128xf32, #tpu.memory_space<vmem>>, vector<1x1x128xf32>
    tpu.vector_store %arg6[%c0_37, %c0_38, %c0_39], %81 {strides = array<i32>} : memref<1x1x128xf32, #tpu.memory_space<vmem>>, vector<1x1x128xf32>,
    return
  }
  func.func @transform_0(%arg0: i32) -> (i32, i32) {
    %c0_i32 = arith.constant 0 : i32
    %c0_i32_0 = arith.constant 0 : i32
    return %arg0, %c0_i32 : i32, i32
  }
  func.func @transform_1(%arg0: i32) -> (i32, i32) {
    %c0_i32 = arith.constant 0 : i32
    %c0_i32_0 = arith.constant 0 : i32
    return %arg0, %c0_i32 : i32, i32
  }
  func.func @transform_2(%arg0: i32) -> (i32, i32, i32) {
    %c0_i32 = arith.constant 0 : i32
    %c0_i32_0 = arith.constant 0 : i32
    %c0_i32_1 = arith.constant 0 : i32
    return %arg0, %c0_i32, %c0_i32_0 : i32, i32, i32
  }
  func.func @transform_3(%arg0: i32) -> (i32, i32, i32) {
    %c0_i32 = arith.constant 0 : i32
    %c0_i32_0 = arith.constant 0 : i32
    %c0_i32_1 = arith.constant 0 : i32
    return %arg0, %c0_i32, %c0_i32_0 : i32, i32, i32
  }
  func.func @transform_4(%arg0: i32) -> (i32, i32, i32) {
    %c0_i32 = arith.constant 0 : i32
    %c0_i32_0 = arith.constant 0 : i32
    %c0_i32_1 = arith.constant 0 : i32
    return %arg0, %c0_i32, %c0_i32_0 : i32, i32, i32
  }
  func.func @transform_5(%arg0: i32) -> (i32, i32, i32) {
    %c0_i32 = arith.constant 0 : i32
    %c0_i32_0 = arith.constant 0 : i32
    %c0_i32_1 = arith.constant 0 : i32
    return %arg0, %c0_i32, %c0_i32_0 : i32, i32, i32
  }
}

</mosaic_0001>

<llo_original>
// kernel: dice_apl_loss.1
$region0: #{dice_apl_loss.1}
  #allocation0 [shape = 'u32[]', space=smem, size = 0x4, offset = 0x4, fixed_abs, tag = 'smem constant byte address 0x4 - core index']
  #allocation1 [shape = 'u32[72,128]{1,0:T(1,128)}', space=vmem, size = 0x9000, scoped, tag = 'internal scratch']
  %s0 = inlined_call_operand.vmem [shape: f32[16,128], index: 0, kind: input, shape index: {}]
  %s1 = inlined_call_operand.vmem [shape: f32[16,128], index: 1, kind: input, shape index: {}]
  %s2 = inlined_call_operand.vmem [shape: f32[1,1,128], index: 2, kind: output, shape index: {0}]
  %s3 = inlined_call_operand.vmem [shape: f32[1,1,128], index: 3, kind: output, shape index: {1}]
  %s4 = inlined_call_operand.vmem [shape: f32[1,1,128], index: 4, kind: output, shape index: {2}]
  %s5 = inlined_call_operand.vmem [shape: f32[1,1,128], index: 5, kind: output, shape index: {3}]
  %6 = xla_tuple %s2, %s3, %s4, %s5
  %s7 = sld [smem:[#allocation0]]
  $region42: #{dice_apl_loss.1} parent=0
    _
  %s9 = ssub.s32 1, %s7
  %s10 = scalar_select 0, %s9, %s7
  // Predicated region
  $region2: #{dice_apl_loss.1} parent=0 // pred_check
    _
  $region3: #{dice_apl_loss.1} parent=0 // pred_check_branch
    %12 = sbr.rel (0) target = $region5
  $region4: #{dice_apl_loss.1} parent=0 // pred_region
    _
  $region5: #{dice_apl_loss.1} parent=0 // pred_fallthru
    _
  // Predicated region
  $region6: #{dice_apl_loss.1} parent=0 // pred_check
    _
  $region7: #{dice_apl_loss.1} parent=0 // pred_check_branch
    %14 = sbr.rel (0) target = $region9
  $region8: #{dice_apl_loss.1} parent=0 // pred_region
    _
  $region9: #{dice_apl_loss.1} parent=0 // pred_fallthru
    _
  %v15 = vld [vmem:[%s0] sm:$0xff]
  %v16 = vld [vmem:[%s0 + $0x8] sm:$0xff]
  %v17 = vld [vmem:[%s1] sm:$0xff]
  %v18 = vld [vmem:[%s1 + $0x8] sm:$0xff]
  %v19 = vxor.u32 %v15, 2147483648
  %v20 = vxor.u32 %v16, 2147483648
  %v21 = vmul.f32 %v19, 1.442695
  %v22 = vpow.pop %v21
  %v23 = vmul.f32 %v20, 1.442695
  %v24 = vpow.pop %v23
  %v25 = vadd.f32 %v22, 1.0
  %v26 = vadd.f32 %v24, 1.0
  %v27 = vrcp.pop %v25
  %v28 = vmul.f32 %v25, %v27
  %v29 = vsub.f32 1.0, %v28
  %v30 = vmul.f32 %v27, %v29
  %v31 = vadd.f32 %v27, %v30
  %vm32 = vweird.f32 %v25
  %vm33 = vweird.f32 %v27
  %vm34 = vmor %vm32, %vm33
  %v35 = vsel %vm34, %v27, %v31
  %v36 = vand.u32 2147483647, %v25
  %vm37 = vcmp.eq.f32.partialorder %v36, 8.507059e+37
  %v38 = vand.u32 %v25, 2147483648
  %v39 = vor.u32 1.1754944e-38, %v38
  %v40 = vsel %vm37, %v39, %v35
  %v41 = vmul.f32 1.0, %v40
  %v42 = vrcp.pop %v26
  %v43 = vmul.f32 %v26, %v42
  %v44 = vsub.f32 1.0, %v43
  %v45 = vmul.f32 %v42, %v44
  %v46 = vadd.f32 %v42, %v45
  %vm47 = vweird.f32 %v26
  %vm48 = vweird.f32 %v42
  %vm49 = vmor %vm47, %vm48
  %v50 = vsel %vm49, %v42, %v46
  %v51 = vand.u32 2147483647, %v26
  %vm52 = vcmp.eq.f32.partialorder %v51, 8.507059e+37
  %v53 = vand.u32 %v26, 2147483648
  %v54 = vor.u32 1.1754944e-38, %v53
  %v55 = vsel %vm52, %v54, %v50
  %v56 = vmul.f32 1.0, %v55
  %v57 = vsub.f32 1.0, %v41
  %v58 = vsub.f32 1.0, %v56
  %v59 = vadd.f32 %v57, 0.05
  %v60 = vadd.f32 %v58, 0.05
  %v61 = vmin.f32 %v59, 1.0
  %v62 = vmin.f32 %v60, 1.0
  %v63 = vmax.f32 %v41, 1e-08
  %v64 = vmax.f32 %v56, 1e-08
  %v65 = vmax.f32 %v61, 1e-08
  %v66 = vmax.f32 %v62, 1e-08
  %v67 = vsub.f32 1.0, %v63
  %v68 = vsub.f32 1.0, %v64
  %v69 = vlog2.pop %v63
  %v70 = vmul.f32 %v69, 0.6931472
  %v71 = vlog2.pop %v64
  %v72 = vmul.f32 %v71, 0.6931472
  %v73 = vadd.f32 %v70, %v67
  %v74 = vadd.f32 %v72, %v68
  %v75 = vmul.f32 %v67, -1.25
  %v76 = vmul.f32 %v68, -1.25
  %v77 = vmul.f32 %v75, %v67
  %v78 = vmul.f32 %v76, %v68
  %v79 = vadd.f32 %v73, %v77
  %v80 = vadd.f32 %v74, %v78
  %v81 = vmul.f32 %v17, %v79
  %v82 = vmul.f32 %v18, %v80
  %v83 = vsub.f32 1.0, %v17
  %v84 = vsub.f32 1.0, %v18
  %v85 = vlog2.pop %v65
  %v86 = vmul.f32 %v85, 0.6931472
  %v87 = vlog2.pop %v66
  %v88 = vmul.f32 %v87, 0.6931472
  %v89 = vmul.f32 %v65, 0.0
  %v90 = vmul.f32 %v66, 0.0
  %v91 = vadd.f32 %v86, %v89
  %v92 = vadd.f32 %v88, %v90
  %v93 = vmul.f32 %v83, %v91
  %v94 = vmul.f32 %v84, %v92
  %v95 = vadd.f32 %v81, %v93
  %v96 = vadd.f32 %v82, %v94
  %v97 = vmul.f32 %v41, %v17
  %v98 = vmul.f32 %v56, %v18
  %v99 = vmul.f32 %v61, %v83
  %v100 = vmul.f32 %v62, %v84
  %v101 = vadd.f32 %v97, %v99
  %v102 = vadd.f32 %v98, %v100
  %v103 = vmul.f32 %v17, 0.0
  %v104 = vmul.f32 %v18, 0.0
  %v105 = vmul.f32 %v83, 4.0
  %v106 = vmul.f32 %v84, 4.0
  %v107 = vadd.f32 %v103, %v105
  %v108 = vadd.f32 %v104, %v106
  %v109 = vsub.f32 1.0, %v101
  %v110 = vsub.f32 1.0, %v102
  %vm111 = vcmp.gt.f32.partialorder %v109, 0.0
  %vm112 = vcmp.gt.f32.partialorder %v110, 0.0
  %v113 = vsel %vm111, %v109, 1.0
  %v114 = vsel %vm112, %v110, 1.0
  %v115 = vlog2.pop %v113
  %v116 = vmul.f32 %v115, 0.6931472
  %v117 = vlog2.pop %v114
  %v118 = vmul.f32 %v117, 0.6931472
  %v119 = vmul.f32 %v107, %v116
  %v120 = vmul.f32 %v108, %v118
  %v121 = vmul.f32 %v119, 1.442695
  %v122 = vpow.pop %v121
  %v123 = vmul.f32 %v120, 1.442695
  %v124 = vpow.pop %v123
  %vm125 = vcmp.eq.f32.partialorder %v107, 0.0
  %vm126 = vcmp.eq.f32.partialorder %v108, 0.0
  %v127 = vsel %vm125, 1.0, 0.0
  %v128 = vsel %vm126, 1.0, 0.0
  %v129 = vsel %vm111, %v122, %v127
  %v130 = vsel %vm112, %v124, %v128
  %v131 = vmul.f32 %v95, %v129
  %v132 = vmul.f32 %v96, %v130
  %v133 = vadd.f32 %v131, %v132
  %v134 = vrot.slane %v133, 4
  %v135 = vadd.f32 %v133, %v134
  %v136 = vrot.slane %v135, 2
  %v137 = vadd.f32 %v135, %v136
  %v138 = vrot.slane %v137, 1
  %v139 = vadd.f32 %v137, %v138
  %140 = vst [vmem:[%s2] sm:$0x1] %v139
  %v141 = vadd.f32 %v97, %v98
  %v142 = vrot.slane %v141, 4
  %v143 = vadd.f32 %v141, %v142
  %v144 = vrot.slane %v143, 2
  %v145 = vadd.f32 %v143, %v144
  %v146 = vrot.slane %v145, 1
  %v147 = vadd.f32 %v145, %v146
  %148 = vst [vmem:[%s3] sm:$0x1] %v147
  %v149 = vadd.f32 %v41, %v56
  %v150 = vrot.slane %v149, 4
  %v151 = vadd.f32 %v149, %v150
  %v152 = vrot.slane %v151, 2
  %v153 = vadd.f32 %v151, %v152
  %v154 = vrot.slane %v153, 1
  %v155 = vadd.f32 %v153, %v154
  %156 = vst [vmem:[%s4] sm:$0x1] %v155
  %v157 = vadd.f32 %v17, %v18
  %v158 = vrot.slane %v157, 4
  %v159 = vadd.f32 %v157, %v158
  %v160 = vrot.slane %v159, 2
  %v161 = vadd.f32 %v159, %v160
  %v162 = vrot.slane %v161, 1
  %v163 = vadd.f32 %v161, %v162
  %164 = vst [vmem:[%s5] sm:$0x1] %v163
  // Predicated region
  $region10: #{dice_apl_loss.1} parent=0 // pred_check
    _
  $region11: #{dice_apl_loss.1} parent=0 // pred_check_branch
    %166 = sbr.rel (0) target = $region13
  $region12: #{dice_apl_loss.1} parent=0 // pred_region
    _
  $region13: #{dice_apl_loss.1} parent=0 // pred_fallthru
    _
  // Predicated region
  $region14: #{dice_apl_loss.1} parent=0 // pred_check
    _
  $region15: #{dice_apl_loss.1} parent=0 // pred_check_branch
    %168 = sbr.rel (0) target = $region17
  $region16: #{dice_apl_loss.1} parent=0 // pred_region
    _
  $region17: #{dice_apl_loss.1} parent=0 // pred_fallthru
    _
  // Predicated region
  $region18: #{dice_apl_loss.1} parent=0 // pred_check
    _
  $region19: #{dice_apl_loss.1} parent=0 // pred_check_branch
    %170 = sbr.rel (0) target = $region21
  $region20: #{dice_apl_loss.1} parent=0 // pred_region
    _
  $region21: #{dice_apl_loss.1} parent=0 // pred_fallthru
    _
  // Predicated region
  $region22: #{dice_apl_loss.1} parent=0 // pred_check
    _
  $region23: #{dice_apl_loss.1} parent=0 // pred_check_branch
    %172 = sbr.rel (0) target = $region25
  $region24: #{dice_apl_loss.1} parent=0 // pred_region
    _
  $region25: #{dice_apl_loss.1} parent=0 // pred_fallthru
    _
  // Predicated region
  $region26: #{dice_apl_loss.1} parent=0 // pred_check
    _
  $region27: #{dice_apl_loss.1} parent=0 // pred_check_branch
    %174 = sbr.rel (0) target = $region29
  $region28: #{dice_apl_loss.1} parent=0 // pred_region
    _
  $region29: #{dice_apl_loss.1} parent=0 // pred_fallthru
    _
  // Predicated region
  $region30: #{dice_apl_loss.1} parent=0 // pred_check
    _
  $region31: #{dice_apl_loss.1} parent=0 // pred_check_branch
    %176 = sbr.rel (0) target = $region33
  $region32: #{dice_apl_loss.1} parent=0 // pred_region
    _
  $region33: #{dice_apl_loss.1} parent=0 // pred_fallthru
    _
  // Predicated region
  $region34: #{dice_apl_loss.1} parent=0 // pred_check
    _
  $region35: #{dice_apl_loss.1} parent=0 // pred_check_branch
    %178 = sbr.rel (0) target = $region37
  $region36: #{dice_apl_loss.1} parent=0 // pred_region
    _
  $region37: #{dice_apl_loss.1} parent=0 // pred_fallthru
    _
  // Predicated region
  $region38: #{dice_apl_loss.1} parent=0 // pred_check
    _
  $region39: #{dice_apl_loss.1} parent=0 // pred_check_branch
    %180 = sbr.rel (0) target = $region41
  $region40: #{dice_apl_loss.1} parent=0 // pred_region
    _
  $region41: #{dice_apl_loss.1} parent=0 // pred_fallthru
    _

</llo_original>
